<compile_context>
chip_gen: v6e
topology: v6e:2x2x1
jax: 0.10.0
libtpu: 0.0.40
codegen_flags: <defaults>
</compile_context>

<pallas_src>
import functools

import jax
import jax.numpy as jnp
from jax.experimental import pallas as pl
from jax.experimental.pallas import tpu as pltpu


# ----------------------------- Pallas kernel -----------------------------

def _eblock_kernel(x_ref, w1_ref, b1_ref, w2_ref, b2_ref, o_ref, xcur_ref,
                   *, H, M, WC):
    """One grid step = one ResBlock applied to the whole (B*H, W*C) activation slab.

    xcur_ref (VMEM scratch, (B*H, W*C) f32) carries the activation across the
    "arbitrary" ResBlock grid axis; it is loaded from x at r==0 and the final
    activation is stored to the output only at the last ResBlock.
    """
    r = pl.program_id(0)

    @pl.when(r == 0)
    def _init():
        xcur_ref[...] = x_ref[...].astype(jnp.float32)

    x = xcur_ref[...]                                          # (M, WC) f32

    # Per-image boundary masks for the H-axis SAME padding: after a circular sublane
    # roll of the batch-folded slab, the first/last row of each image would pick up a
    # row from the neighbouring image -> zero it instead.
    row = jax.lax.broadcasted_iota(jnp.int32, (M, 1), 0)
    top = (row % H) == 0                                       # no h-1 neighbour
    bot = (row % H) == (H - 1)                                 # no h+1 neighbour

    def conv3x3(v, w_ref, b_ref):
        # out[h] = [v[h-1] | v[h] | v[h+1]] @ W_stacked + b, with the W-axis taps
        # and W zero-padding already folded into the banded (3*WC, WC) matrix.
        dn = jnp.where(top, 0.0, pltpu.roll(v, shift=1, axis=0))      # v[h-1]
        up = jnp.where(bot, 0.0, pltpu.roll(v, shift=M - 1, axis=0))  # v[h+1]
        lhs = jnp.concatenate([dn, v, up], axis=-1).astype(jnp.bfloat16)  # (M, 3*WC)
        acc = jnp.dot(lhs, w1 := w_ref[0], preferred_element_type=jnp.float32)
        del w1
        return acc + b_ref[0]                                  # (1, WC) f32 bias row

    h = jnp.maximum(conv3x3(x, w1_ref, b1_ref), 0.0)           # conv1 + ReLU
    y = conv3x3(h, w2_ref, b2_ref) + x                         # conv2 + residual
    xcur_ref[...] = y

    @pl.when(r == pl.num_programs(0) - 1)
    def _store():
        o_ref[...] = y.astype(o_ref.dtype)


# ----------------------------- weight pre-lowering -----------------------------

def _banded_weight(w_oihw, W):
    """OIHW (Cout, Cin, 3, 3) -> (3*W*Cin, W*Cout) kh-stacked banded matrix.

    band[kh][wi*Cin + ci, wo*Cout + co] = w[co, ci, kh, wi - wo + 1] (0 elsewhere),
    stacked along kh so that [rows(h-1) | rows(h) | rows(h+1)] @ band is a SAME
    3x3 conv with the W-axis taps and W zero-padding absorbed into the bands.
    """
    Cout, Cin, KH, KW = w_oihw.shape
    wt = jnp.transpose(w_oihw, (2, 3, 1, 0))                   # (KH, KW, Cin, Cout)
    # E[kw, wi, wo] = 1 iff wi - wo == kw - 1  (input col wi feeds output col wo)
    E = jnp.stack([jnp.eye(W, k=1 - kw, dtype=wt.dtype) for kw in range(KW)])
    band = jnp.einsum("xab,kxio->kaibo", E, wt)                # (KH, W, Cin, W, Cout)
    return band.reshape(KH * W * Cin, W * Cout)


def prepare_eblock_params(params, W):
    """One-time pre-lowering (hoisted out of the per-call forward): banded bf16
    weights stacked over the ResBlock axis + W-tiled f32 bias rows."""
    w1b = jnp.stack([_banded_weight(w1, W) for (w1, _, _, _) in params])   # (R,3WC,WC)
    w2b = jnp.stack([_banded_weight(w2, W) for (_, _, w2, _) in params])
    b1r = jnp.stack([jnp.tile(b1, W)[None, :] for (_, b1, _, _) in params])  # (R,1,WC)
    b2r = jnp.stack([jnp.tile(b2, W)[None, :] for (_, _, _, b2) in params])
    return (w1b.astype(jnp.bfloat16), b1r.astype(jnp.float32),
            w2b.astype(jnp.bfloat16), b2r.astype(jnp.float32))


# ----------------------------- wrapper -----------------------------

@jax.jit
def eblock_forward(x_nchw, prepped):
    """EBlock forward. Input/output NCHW (matches PyTorch)."""
    B, C, H, W = x_nchw.shape
    WC = W * C
    M = B * H
    w1b, b1r, w2b, b2r = prepped
    num_res = w1b.shape[0]

    # NCHW -> NHWC -> (B*H, W*C): channels packed into the lane axis (lane-dense),
    # batch folded into the sublane axis (bigger MXU M, weights fetched once total).
    x = jnp.transpose(x_nchw, (0, 2, 3, 1)).reshape(M, WC)

    kernel = functools.partial(_eblock_kernel, H=H, M=M, WC=WC)
    out = pl.pallas_call(
        kernel,
        out_shape=jax.ShapeDtypeStruct((M, WC), x_nchw.dtype),
        grid_spec=pltpu.PrefetchScalarGridSpec(
            num_scalar_prefetch=0,
            grid=(num_res,),
            in_specs=[
                pl.BlockSpec((M, WC), lambda r: (0, 0)),             # x (DMA'd once)
                pl.BlockSpec((1, 3 * WC, WC), lambda r: (r, 0, 0)),  # conv1 bands bf16
                pl.BlockSpec((1, 1, WC), lambda r: (r, 0, 0)),       # conv1 bias f32
                pl.BlockSpec((1, 3 * WC, WC), lambda r: (r, 0, 0)),  # conv2 bands bf16
                pl.BlockSpec((1, 1, WC), lambda r: (r, 0, 0)),       # conv2 bias f32
            ],
            out_specs=pl.BlockSpec((M, WC), lambda r: (0, 0)),       # written once at end
            scratch_shapes=[pltpu.VMEM((M, WC), jnp.float32)],       # resident activation
        ),
        compiler_params=pltpu.CompilerParams(
            dimension_semantics=("arbitrary",),
            vmem_limit_bytes=32 * 1024 * 1024,
        ),
    )(x, w1b, b1r, w2b, b2r)

    return jnp.transpose(out.reshape(B, H, W, C), (0, 3, 1, 2))      # -> NCHW


# ----------------------------- params -----------------------------

def init_eblock_params(key, out_channel, num_res):
    """Deterministic params. Each ResBlock: (w1, b1, w2, b2), weights OIHW like PyTorch."""
    params = []
    fan_in = out_channel * 3 * 3
    scale = 1.0 / jnp.sqrt(jnp.float32(fan_in))
    for _ in range(num_res):
        key, k1, k2, k3, k4 = jax.random.split(key, 5)
        w1 = jax.random.uniform(k1, (out_channel, out_channel, 3, 3),
                                jnp.float32, -scale, scale)
        b1 = jax.random.uniform(k2, (out_channel,), jnp.float32, -scale, scale)
        w2 = jax.random.uniform(k3, (out_channel, out_channel, 3, 3),
                                jnp.float32, -scale, scale)
        b2 = jax.random.uniform(k4, (out_channel,), jnp.float32, -scale, scale)
        params.append((w1, b1, w2, b2))
    return params


# ----------------------------- reference (plain JAX) -----------------------------

def _ref_conv(x_nchw, w_oihw, b, relu):
    y = jax.lax.conv_general_dilated(
        x_nchw, w_oihw, window_strides=(1, 1), padding="SAME",
        dimension_numbers=("NCHW", "OIHW", "NCHW"))
    y = y + b.reshape(1, -1, 1, 1)
    if relu:
        y = jnp.maximum(y, 0.0)
    return y


def eblock_ref(x_nchw, params):
    x = x_nchw
    for (w1, b1, w2, b2) in params:
        h = _ref_conv(x, w1, b1, relu=True)
        x = _ref_conv(h, w2, b2, relu=False) + x
    return x


# ----------------------------- main -----------------------------

if __name__ == "__main__":
    B, C, H, W = 2, 8, 16, 16          # W*C = 128 -> fully lane-dense
    num_res = 8

    key = jax.random.PRNGKey(0)
    kx, kp = jax.random.split(key)
    x = jax.random.normal(kx, (B, C, H, W), jnp.float32)
    params = init_eblock_params(kp, out_channel=C, num_res=num_res)

    # One-time weight pre-lowering (band construction is NOT part of the forward).
    prepped = prepare_eblock_params(params, W)

    out = jax.block_until_ready(eblock_forward(x, prepped))
    ref = jax.block_until_ready(eblock_ref(x, params))

    assert out.shape == (B, C, H, W)
    # bf16 bands / bf16 matmul LHS (f32 accumulation) -> ~1e-2 relative error vs the
    # f32 reference over 16 stacked convs; tolerance relaxed accordingly.
    assert jnp.allclose(out, ref, atol=1e-1, rtol=1e-1), "mismatch vs JAX reference"

    print("KERNEL_OK")
</pallas_src>

<mosaic_0001>
module attributes {stable_mosaic.version = 11 : i64} {
  func.func @_eblock_kernel(%arg0: i32, %arg1: memref<32x128xf32, #tpu.memory_space<vmem>>, %arg2: memref<1x384x128xbf16, #tpu.memory_space<vmem>>, %arg3: memref<1x1x128xf32, #tpu.memory_space<vmem>>, %arg4: memref<1x384x128xbf16, #tpu.memory_space<vmem>>, %arg5: memref<1x1x128xf32, #tpu.memory_space<vmem>>, %arg6: memref<32x128xf32, #tpu.memory_space<vmem>>, %arg7: memref<32x128xf32, #tpu.memory_space<vmem>>) attributes {dimension_semantics = [#tpu.dimension_semantics<arbitrary>], iteration_bounds = array<i64: 8>, scalar_prefetch = 0 : i64, scratch_operands = 1 : i64, tpu.core_type = #tpu.core_type<tc>, window_params = [{pipeline_mode = #tpu.pipeline_mode<synchronous>, transform_indices = @transform_0, window_bounds = array<i64: 32, 128>}, {transform_indices = @transform_1, window_bounds = array<i64: 1, 384, 128>}, {transform_indices = @transform_2, window_bounds = array<i64: 1, 1, 128>}, {transform_indices = @transform_3, window_bounds = array<i64: 1, 384, 128>}, {transform_indices = @transform_4, window_bounds = array<i64: 1, 1, 128>}, {pipeline_mode = #tpu.pipeline_mode<synchronous>, transform_indices = @transform_5, window_bounds = array<i64: 32, 128>}]} {
    %c0_i32 = arith.constant 0 : i32
    %0 = arith.cmpi eq, %arg0, %c0_i32 : i32
    %1 = arith.extui %0 : i1 to i32
    %c0_i32_0 = arith.constant 0 : i32
    %2 = arith.cmpi ne, %1, %c0_i32_0 : i32
    scf.if %2 {
      %c0_37 = arith.constant 0 : index
      %c0_38 = arith.constant 0 : index
      %86 = vector.load %arg1[%c0_37, %c0_38] : memref<32x128xf32, #tpu.memory_space<vmem>>, vector<32x128xf32>
      %c0_39 = arith.constant 0 : index
      %c0_40 = arith.constant 0 : index
      %87 = vector.load %arg7[%c0_39, %c0_40] : memref<32x128xf32, #tpu.memory_space<vmem>>, vector<32x128xf32>
      tpu.vector_store %arg7[%c0_39, %c0_40], %86 {strides = array<i32>} : memref<32x128xf32, #tpu.memory_space<vmem>>, vector<32x128xf32>,
    } else {
    }
    %c0 = arith.constant 0 : index
    %c0_1 = arith.constant 0 : index
    %3 = vector.load %arg7[%c0, %c0_1] : memref<32x128xf32, #tpu.memory_space<vmem>>, vector<32x128xf32>
    %4 = tpu.iota {dimensions = array<i32: 0>} : vector<32x1xi32>
    %c16_i32 = arith.constant 16 : i32
    %c0_i32_2 = arith.constant 0 : i32
    %5 = arith.cmpi eq, %c16_i32, %c0_i32_2 : i32
    %c1_i32 = arith.constant 1 : i32
    %6 = arith.select %5, %c1_i32, %c16_i32 : i32
    %7 = vector.broadcast %6 : i32 to vector<32x1xi32>
    %8 = arith.remsi %4, %7 : vector<32x1xi32>
    %c0_i32_3 = arith.constant 0 : i32
    %9 = vector.broadcast %c0_i32_3 : i32 to vector<32x1xi32>
    %10 = arith.cmpi ne, %8, %9 : vector<32x1xi32>
    %c0_i32_4 = arith.constant 0 : i32
    %11 = vector.broadcast %c0_i32_4 : i32 to vector<32x1xi32>
    %12 = arith.cmpi slt, %8, %11 : vector<32x1xi32>
    %c0_i32_5 = arith.constant 0 : i32
    %13 = arith.cmpi slt, %6, %c0_i32_5 : i32
    %14 = vector.broadcast %13 : i1 to vector<32x1xi1>
    %15 = vector.broadcast %14 : vector<32x1xi1> to vector<32x1xi1>
    %16 = arith.xori %12, %15 : vector<32x1xi1>
    %17 = arith.andi %16, %10 : vector<32x1xi1>
    %18 = vector.broadcast %6 : i32 to vector<32x1xi32>
    %19 = arith.addi %8, %18 : vector<32x1xi32>
    %20 = arith.select %17, %19, %8 : vector<32x1xi1>, vector<32x1xi32>
    %c0_i32_6 = arith.constant 0 : i32
    %21 = vector.broadcast %c0_i32_6 : i32 to vector<32x1xi32>
    %22 = arith.cmpi eq, %20, %21 : vector<32x1xi32>
    %c16_i32_7 = arith.constant 16 : i32
    %c0_i32_8 = arith.constant 0 : i32
    %23 = arith.cmpi eq, %c16_i32_7, %c0_i32_8 : i32
    %c1_i32_9 = arith.constant 1 : i32
    %24 = arith.select %23, %c1_i32_9, %c16_i32_7 : i32
    %25 = vector.broadcast %24 : i32 to vector<32x1xi32>
    %26 = arith.remsi %4, %25 : vector<32x1xi32>
    %c0_i32_10 = arith.constant 0 : i32
    %27 = vector.broadcast %c0_i32_10 : i32 to vector<32x1xi32>
    %28 = arith.cmpi ne, %26, %27 : vector<32x1xi32>
    %c0_i32_11 = arith.constant 0 : i32
    %29 = vector.broadcast %c0_i32_11 : i32 to vector<32x1xi32>
    %30 = arith.cmpi slt, %26, %29 : vector<32x1xi32>
    %c0_i32_12 = arith.constant 0 : i32
    %31 = arith.cmpi slt, %24, %c0_i32_12 : i32
    %32 = vector.broadcast %31 : i1 to vector<32x1xi1>
    %33 = vector.broadcast %32 : vector<32x1xi1> to vector<32x1xi1>
    %34 = arith.xori %30, %33 : vector<32x1xi1>
    %35 = arith.andi %34, %28 : vector<32x1xi1>
    %36 = vector.broadcast %24 : i32 to vector<32x1xi32>
    %37 = arith.addi %26, %36 : vector<32x1xi32>
    %38 = arith.select %35, %37, %26 : vector<32x1xi1>, vector<32x1xi32>
    %c15_i32 = arith.constant 15 : i32
    %39 = vector.broadcast %c15_i32 : i32 to vector<32x1xi32>
    %40 = arith.cmpi eq, %38, %39 : vector<32x1xi32>
    %c1_i32_13 = arith.constant 1 : i32
    %41 = tpu.dynamic_rotate %3 by %c1_i32_13 dim 0 : vector<32x128xf32>, i32 -> vector<32x128xf32>
    %cst = arith.constant 0.000000e+00 : f32
    %42 = vector.shape_cast %22 : vector<32x1xi1> to vector<32x1xi1>
    %43 = vector.broadcast %42 : vector<32x1xi1> to vector<32x128xi1>
    %44 = vector.broadcast %cst : f32 to vector<32x128xf32>
    %45 = arith.select %43, %44, %41 : vector<32x128xi1>, vector<32x128xf32>
    %c31_i32 = arith.constant 31 : i32
    %46 = tpu.dynamic_rotate %3 by %c31_i32 dim 0 : vector<32x128xf32>, i32 -> vector<32x128xf32>
    %cst_14 = arith.constant 0.000000e+00 : f32
    %47 = vector.shape_cast %40 : vector<32x1xi1> to vector<32x1xi1>
    %48 = vector.broadcast %47 : vector<32x1xi1> to vector<32x128xi1>
    %49 = vector.broadcast %cst_14 : f32 to vector<32x128xf32>
    %50 = arith.select %48, %49, %46 : vector<32x128xi1>, vector<32x128xf32>
    %51 = tpu.concatenate %45, %3, %50 in 1 : vector<32x128xf32>, vector<32x128xf32>, vector<32x128xf32> -> vector<32x384xf32>
    %52 = arith.truncf %51 : vector<32x384xf32> to vector<32x384xbf16>
    %c0_15 = arith.constant 0 : index
    %c0_16 = arith.constant 0 : index
    %c0_17 = arith.constant 0 : index
    %53 = vector.load %arg2[%c0_15, %c0_16, %c0_17] : memref<1x384x128xbf16, #tpu.memory_space<vmem>>, vector<1x384x128xbf16>
    %54 = vector.shape_cast %53 : vector<1x384x128xbf16> to vector<384x128xbf16>
    %cst_18 = arith.constant dense<0.000000e+00> : vector<32x128xf32>
    %55 = tpu.matmul %52, %54, %cst_18 {dimension_numbers = #tpu.dot_dimension_numbers<[1], [0], [0], [1], [0, 0, 1, 1], [], []>} : vector<32x384xbf16>, vector<384x128xbf16>, vector<32x128xf32> -> vector<32x128xf32>
    %c0_19 = arith.constant 0 : index
    %c0_20 = arith.constant 0 : index
    %c0_21 = arith.constant 0 : index
    %56 = vector.load %arg3[%c0_19, %c0_20, %c0_21] : memref<1x1x128xf32, #tpu.memory_space<vmem>>, vector<1x1x128xf32>
    %57 = vector.shape_cast %56 : vector<1x1x128xf32> to vector<1x128xf32>
    %58 = vector.broadcast %57 : vector<1x128xf32> to vector<32x128xf32>
    %59 = arith.addf %55, %58 : vector<32x128xf32>
    %cst_22 = arith.constant 0.000000e+00 : f32
    %60 = vector.broadcast %cst_22 : f32 to vector<32x128xf32>
    %61 = arith.maximumf %59, %60 : vector<32x128xf32>
    %c1_i32_23 = arith.constant 1 : i32
    %62 = tpu.dynamic_rotate %61 by %c1_i32_23 dim 0 : vector<32x128xf32>, i32 -> vector<32x128xf32>
    %cst_24 = arith.constant 0.000000e+00 : f32
    %63 = vector.shape_cast %22 : vector<32x1xi1> to vector<32x1xi1>
    %64 = vector.broadcast %63 : vector<32x1xi1> to vector<32x128xi1>
    %65 = vector.broadcast %cst_24 : f32 to vector<32x128xf32>
    %66 = arith.select %64, %65, %62 : vector<32x128xi1>, vector<32x128xf32>
    %c31_i32_25 = arith.constant 31 : i32
    %67 = tpu.dynamic_rotate %61 by %c31_i32_25 dim 0 : vector<32x128xf32>, i32 -> vector<32x128xf32>
    %cst_26 = arith.constant 0.000000e+00 : f32
    %68 = vector.shape_cast %40 : vector<32x1xi1> to vector<32x1xi1>
    %69 = vector.broadcast %68 : vector<32x1xi1> to vector<32x128xi1>
    %70 = vector.broadcast %cst_26 : f32 to vector<32x128xf32>
    %71 = arith.select %69, %70, %67 : vector<32x128xi1>, vector<32x128xf32>
    %72 = tpu.concatenate %66, %61, %71 in 1 : vector<32x128xf32>, vector<32x128xf32>, vector<32x128xf32> -> vector<32x384xf32>
    %73 = arith.truncf %72 : vector<32x384xf32> to vector<32x384xbf16>
    %c0_27 = arith.constant 0 : index
    %c0_28 = arith.constant 0 : index
    %c0_29 = arith.constant 0 : index
    %74 = vector.load %arg4[%c0_27, %c0_28, %c0_29] : memref<1x384x128xbf16, #tpu.memory_space<vmem>>, vector<1x384x128xbf16>
    %75 = vector.shape_cast %74 : vector<1x384x128xbf16> to vector<384x128xbf16>
    %cst_30 = arith.constant dense<0.000000e+00> : vector<32x128xf32>
    %76 = tpu.matmul %73, %75, %cst_30 {dimension_numbers = #tpu.dot_dimension_numbers<[1], [0], [0], [1], [0, 0, 1, 1], [], []>} : vector<32x384xbf16>, vector<384x128xbf16>, vector<32x128xf32> -> vector<32x128xf32>
    %c0_31 = arith.constant 0 : index
    %c0_32 = arith.constant 0 : index
    %c0_33 = arith.constant 0 : index
    %77 = vector.load %arg5[%c0_31, %c0_32, %c0_33] : memref<1x1x128xf32, #tpu.memory_space<vmem>>, vector<1x1x128xf32>
    %78 = vector.shape_cast %77 : vector<1x1x128xf32> to vector<1x128xf32>
    %79 = vector.broadcast %78 : vector<1x128xf32> to vector<32x128xf32>
    %80 = arith.addf %76, %79 : vector<32x128xf32>
    %81 = arith.addf %80, %3 : vector<32x128xf32>
    %c0_34 = arith.constant 0 : index
    %c0_35 = arith.constant 0 : index
    %82 = vector.load %arg7[%c0_34, %c0_35] : memref<32x128xf32, #tpu.memory_space<vmem>>, vector<32x128xf32>
    tpu.vector_store %arg7[%c0_34, %c0_35], %81 {strides = array<i32>} : memref<32x128xf32, #tpu.memory_space<vmem>>, vector<32x128xf32>,
    %c7_i32 = arith.constant 7 : i32
    %83 = arith.cmpi eq, %arg0, %c7_i32 : i32
    %84 = arith.extui %83 : i1 to i32
    %c0_i32_36 = arith.constant 0 : i32
    %85 = arith.cmpi ne, %84, %c0_i32_36 : i32
    scf.if %85 {
      %c0_37 = arith.constant 0 : index
      %c0_38 = arith.constant 0 : index
      %86 = vector.load %arg6[%c0_37, %c0_38] : memref<32x128xf32, #tpu.memory_space<vmem>>, vector<32x128xf32>
      tpu.vector_store %arg6[%c0_37, %c0_38], %81 {strides = array<i32>} : memref<32x128xf32, #tpu.memory_space<vmem>>, vector<32x128xf32>,
    } else {
    }
    return
  }
  func.func @transform_0(%arg0: i32) -> (i32, i32) {
    %c0_i32 = arith.constant 0 : i32
    %c0_i32_0 = arith.constant 0 : i32
    %c0_i32_1 = arith.constant 0 : i32
    return %c0_i32, %c0_i32_0 : i32, i32
  }
  func.func @transform_1(%arg0: i32) -> (i32, i32, i32) {
    %c0_i32 = arith.constant 0 : i32
    %c0_i32_0 = arith.constant 0 : i32
    %c0_i32_1 = arith.constant 0 : i32
    return %arg0, %c0_i32, %c0_i32_0 : i32, i32, i32
  }
  func.func @transform_2(%arg0: i32) -> (i32, i32, i32) {
    %c0_i32 = arith.constant 0 : i32
    %c0_i32_0 = arith.constant 0 : i32
    %c0_i32_1 = arith.constant 0 : i32
    return %arg0, %c0_i32, %c0_i32_0 : i32, i32, i32
  }
  func.func @transform_3(%arg0: i32) -> (i32, i32, i32) {
    %c0_i32 = arith.constant 0 : i32
    %c0_i32_0 = arith.constant 0 : i32
    %c0_i32_1 = arith.constant 0 : i32
    return %arg0, %c0_i32, %c0_i32_0 : i32, i32, i32
  }
  func.func @transform_4(%arg0: i32) -> (i32, i32, i32) {
    %c0_i32 = arith.constant 0 : i32
    %c0_i32_0 = arith.constant 0 : i32
    %c0_i32_1 = arith.constant 0 : i32
    return %arg0, %c0_i32, %c0_i32_0 : i32, i32, i32
  }
  func.func @transform_5(%arg0: i32) -> (i32, i32) {
    %c0_i32 = arith.constant 0 : i32
    %c0_i32_0 = arith.constant 0 : i32
    %c0_i32_1 = arith.constant 0 : i32
    return %c0_i32, %c0_i32_0 : i32, i32
  }
}

</mosaic_0001>

<llo_original>
// kernel: eblock_forward.1
$region0: #{eblock_forward.1}
  #allocation0 [shape = 'u32[]', space=smem, size = 0x4, offset = 0x4, fixed_abs, tag = 'smem constant byte address 0x4 - core index']
  #allocation1 [shape = 'u32[144,128]{1,0:T(1,128)}', space=vmem, size = 0x12000, scoped, tag = 'internal scratch']
  #allocation2 [shape = 'f32[32,128]{1,0:T(8,128)}', space=vmem, size = 0x4000, scoped, tag = 'scratch operand']
  %s0 = inlined_call_operand.vmem [shape: f32[32,128], index: 0, kind: input, shape index: {}]
  %s1 = inlined_call_operand.hbm [shape: bf16[8,384,128], index: 1, kind: input, shape index: {}]
  %s2 = inlined_call_operand.vmem [shape: f32[8,1,128], index: 2, kind: input, shape index: {}]
  %s3 = inlined_call_operand.hbm [shape: bf16[8,384,128], index: 3, kind: input, shape index: {}]
  %s4 = inlined_call_operand.vmem [shape: f32[8,1,128], index: 4, kind: input, shape index: {}]
  %s5 = inlined_call_operand.vmem [shape: f32[32,128], index: 5, kind: output, shape index: {}]
  %s6 = sld [smem:[#allocation0]]
  $region69: #{eblock_forward.1} parent=0
    _
  %s8 = ssub.s32 1, %s6
  %s9 = scalar_select 0, %s8, %s6
  $region1: #{eblock_forward.1} parent=0
    #allocation3 [shape = 'u8[196608]{0}', space=vmem, size = 0x30000, scoped, tag = 'input window, operand 1']
    #allocation4 [shape = 's32[2]{0}', space=sflag, size = 0x8, scoped, tag = 'scoped memory for eblock_forward.1']
    #allocation5 [shape = 'u8[196608]{0}', space=vmem, size = 0x30000, scoped, tag = 'input window, operand 3']
    #allocation6 [shape = 's32[2]{0}', space=sflag, size = 0x8, scoped, tag = 'scoped memory for eblock_forward.1']
    %10 = vsyncpa [#allocation4], 0
    %s11 = scalar_lea.sflag [#allocation4], 1
    %12 = vsyncpa %s11, 0
    %13 = vsyncpa [#allocation6], 0
    %s14 = scalar_lea.sflag [#allocation6], 1
    %15 = vsyncpa %s14, 0
    loop: start=0, step=1, limit=10
    $region2: #{eblock_forward.1} parent=1 // loop_pre_header
      _
    $region3: #{eblock_forward.1} parent=1 // loop_header
      %s17 = sphi 0, %s21
      %p18 = scmp.ge.s32.totalorder %s17, 10
      %s25 = sphi 0, %s25
      %s27 = sphi 0, %s25
      %s28 = sphi 0, %s27
      %s42 = sphi 0, %s28
      %s48 = sphi 0, %s50
      %s51 = sphi 0, %s48
      %s52 = sphi 0, %s51
      %s68 = sphi 0, %s52
      %s74 = sphi 0, %s76
      %s77 = sphi 0, %s74
      %s78 = sphi 0, %s77
      %s94 = sphi 0, %s78
      %s100 = sphi 0, %s102
      %s103 = sphi 0, %s100
      %s104 = sphi 0, %s103
      %s120 = sphi 0, %s104
      %s126 = sphi 0, %s128
      %s129 = sphi 0, %s126
      %s130 = sphi 0, %s129
      %s146 = sphi 0, %s130
      %s150 = sphi 0, %s150
      %s152 = sphi 0, %s150
      %s153 = sphi 0, %s152
      %s167 = sphi 0, %s153
    $region4: #{eblock_forward.1} parent=1 // loop_header_branch
      %20 = sbr.rel (%p18) target = $region8
    $region5: #{eblock_forward.1} parent=1 // loop_body
      %s22 = ssub.s32 %s17, 1
      %s23 = ssub.s32 %s17, 2
      %s24 = sadd.s32 %s17, 1
      %s26 = sadd.s32 %s25, 1
      %p29 = scmp.eq.s32.totalorder %s17, 7
      %p30 = scmp.ne.s32.totalorder %s25, %s27
      %p31 = scmp.eq.s32.totalorder %s17, 0
      %p32 = por %p30, %p31
      %p33 = scmp.ne.s32.totalorder %s25, %s27
      %p34 = scmp.eq.s32.totalorder %s22, 7
      %p35 = por %p33, %p34
      %p36 = scmp.ne.s32.totalorder %s27, %s28
      %p37 = scmp.eq.s32.totalorder %s22, 0
      %p38 = por %p36, %p37
      %p39 = scmp.ne.s32.totalorder %s27, %s28
      %p40 = scmp.eq.s32.totalorder %s23, 7
      %p41 = por %p39, %p40
      %p43 = scmp.ne.s32.totalorder %s28, %s42
      %p44 = scmp.eq.s32.totalorder %s23, 0
      %p45 = por %p43, %p44
      %s46 = ssub.s32 %s17, %s24
      %p47 = scmp.eq.s32.totalorder %s46, 0
      %s49 = sadd.s32 %s48, 1
      %s50 = scalar_select %p47, %s48, %s49
      %p53 = pneg %p47
      %p54 = scmp.eq.s32.totalorder %s17, 7
      %p55 = por %p53, %p54
      %p56 = scmp.ne.s32.totalorder %s48, %s51
      %p57 = scmp.eq.s32.totalorder %s17, 0
      %p58 = por %p56, %p57
      %p59 = scmp.ne.s32.totalorder %s48, %s51
      %p60 = scmp.eq.s32.totalorder %s22, 7
      %p61 = por %p59, %p60
      %p62 = scmp.ne.s32.totalorder %s51, %s52
      %p63 = scmp.eq.s32.totalorder %s22, 0
      %p64 = por %p62, %p63
      %p65 = scmp.ne.s32.totalorder %s51, %s52
      %p66 = scmp.eq.s32.totalorder %s23, 7
      %p67 = por %p65, %p66
      %p69 = scmp.ne.s32.totalorder %s52, %s68
      %p70 = scmp.eq.s32.totalorder %s23, 0
      %p71 = por %p69, %p70
      %s72 = ssub.s32 %s17, %s24
      %p73 = scmp.eq.s32.totalorder %s72, 0
      %s75 = sadd.s32 %s74, 1
      %s76 = scalar_select %p73, %s74, %s75
      %p79 = pneg %p73
      %p80 = scmp.eq.s32.totalorder %s17, 7
      %p81 = por %p79, %p80
      %p82 = scmp.ne.s32.totalorder %s74, %s77
      %p83 = scmp.eq.s32.totalorder %s17, 0
      %p84 = por %p82, %p83
      %p85 = scmp.ne.s32.totalorder %s74, %s77
      %p86 = scmp.eq.s32.totalorder %s22, 7
      %p87 = por %p85, %p86
      %p88 = scmp.ne.s32.totalorder %s77, %s78
      %p89 = scmp.eq.s32.totalorder %s22, 0
      %p90 = por %p88, %p89
      %p91 = scmp.ne.s32.totalorder %s77, %s78
      %p92 = scmp.eq.s32.totalorder %s23, 7
      %p93 = por %p91, %p92
      %p95 = scmp.ne.s32.totalorder %s78, %s94
      %p96 = scmp.eq.s32.totalorder %s23, 0
      %p97 = por %p95, %p96
      %s98 = ssub.s32 %s17, %s24
      %p99 = scmp.eq.s32.totalorder %s98, 0
      %s101 = sadd.s32 %s100, 1
      %s102 = scalar_select %p99, %s100, %s101
      %p105 = pneg %p99
      %p106 = scmp.eq.s32.totalorder %s17, 7
      %p107 = por %p105, %p106
      %p108 = scmp.ne.s32.totalorder %s100, %s103
      %p109 = scmp.eq.s32.totalorder %s17, 0
      %p110 = por %p108, %p109
      %p111 = scmp.ne.s32.totalorder %s100, %s103
      %p112 = scmp.eq.s32.totalorder %s22, 7
      %p113 = por %p111, %p112
      %p114 = scmp.ne.s32.totalorder %s103, %s104
      %p115 = scmp.eq.s32.totalorder %s22, 0
      %p116 = por %p114, %p115
      %p117 = scmp.ne.s32.totalorder %s103, %s104
      %p118 = scmp.eq.s32.totalorder %s23, 7
      %p119 = por %p117, %p118
      %p121 = scmp.ne.s32.totalorder %s104, %s120
      %p122 = scmp.eq.s32.totalorder %s23, 0
      %p123 = por %p121, %p122
      %s124 = ssub.s32 %s17, %s24
      %p125 = scmp.eq.s32.totalorder %s124, 0
      %s127 = sadd.s32 %s126, 1
      %s128 = scalar_select %p125, %s126, %s127
      %p131 = pneg %p125
      %p132 = scmp.eq.s32.totalorder %s17, 7
      %p133 = por %p131, %p132
      %p134 = scmp.ne.s32.totalorder %s126, %s129
      %p135 = scmp.eq.s32.totalorder %s17, 0
      %p136 = por %p134, %p135
      %p137 = scmp.ne.s32.totalorder %s126, %s129
      %p138 = scmp.eq.s32.totalorder %s22, 7
      %p139 = por %p137, %p138
      %p140 = scmp.ne.s32.totalorder %s129, %s130
      %p141 = scmp.eq.s32.totalorder %s22, 0
      %p142 = por %p140, %p141
      %p143 = scmp.ne.s32.totalorder %s129, %s130
      %p144 = scmp.eq.s32.totalorder %s23, 7
      %p145 = por %p143, %p144
      %p147 = scmp.ne.s32.totalorder %s130, %s146
      %p148 = scmp.eq.s32.totalorder %s23, 0
      %p149 = por %p147, %p148
      %s151 = sadd.s32 %s150, 1
      %p154 = scmp.eq.s32.totalorder %s17, 7
      %p155 = scmp.ne.s32.totalorder %s150, %s152
      %p156 = scmp.eq.s32.totalorder %s17, 0
      %p157 = por %p155, %p156
      %p158 = scmp.ne.s32.totalorder %s150, %s152
      %p159 = scmp.eq.s32.totalorder %s22, 7
      %p160 = por %p158, %p159
      %p161 = scmp.ne.s32.totalorder %s152, %s153
      %p162 = scmp.eq.s32.totalorder %s22, 0
      %p163 = por %p161, %p162
      %p164 = scmp.ne.s32.totalorder %s152, %s153
      %p165 = scmp.eq.s32.totalorder %s23, 7
      %p166 = por %p164, %p165
      %p168 = scmp.ne.s32.totalorder %s153, %s167
      %p169 = scmp.eq.s32.totalorder %s23, 0
      %p170 = por %p168, %p169
      %p171 = scmp.le.s32.totalorder 1, %s17
      %p172 = scmp.lt.s32.totalorder %s17, 9
      %p173 = pnand %p171, %p172
      %p174 = pneg %p173
      // Predicated region
      $region9: #{eblock_forward.1} parent=5 // pred_check
        _
      $region10: #{eblock_forward.1} parent=5 // pred_check_branch
        %176 = sbr.rel (%p173) target = $region12
      $region11: #{eblock_forward.1} parent=5 // pred_region
        %s177 = ssub.s32 %s17, 1
        // Predicated region
        $region13: #{eblock_forward.1} parent=11 // pred_check
          %p178 = pneg %p38
        $region14: #{eblock_forward.1} parent=11 // pred_check_branch
          %180 = sbr.rel (%p178) target = $region16
        $region15: #{eblock_forward.1} parent=11 // pred_region
          _
        $region16: #{eblock_forward.1} parent=11 // pred_fallthru
          _
      $region12: #{eblock_forward.1} parent=5 // pred_fallthru
        _
      %p181 = scmp.lt.s32.totalorder %s17, 8
      // Predicated region
      $region17: #{eblock_forward.1} parent=5 // pred_check
        %p182 = pneg %p181
      $region18: #{eblock_forward.1} parent=5 // pred_check_branch
        %184 = sbr.rel (%p182) target = $region20
      $region19: #{eblock_forward.1} parent=5 // pred_region
        // Predicated region
        $region21: #{eblock_forward.1} parent=19 // pred_check
          %p185 = pneg %p58
        $region22: #{eblock_forward.1} parent=19 // pred_check_branch
          %187 = sbr.rel (%p185) target = $region24
        $region23: #{eblock_forward.1} parent=19 // pred_region
          %s188 = sand.u32 %s48, 1
          %s189 = scalar_lea.sflag [#allocation4], %s188
          %s190 = sand.u32 %s48, 1
          %s191 = smul.addr %s190, 192
          %s192 = scalar_lea.vmem [#allocation3], %s191
          %s194 = ssub.s32 3072, 3072
          %195 = vsyncadd %s189, %s194
          %s196 = smul.addr %s17, 48
          %s197 = smul.addr %s196, 64
          %s198 = scalar_lea.hbm %s1, %s197
          %s199 = sshll.u32 %s192, 4
          %s200 = int_to_ptr.vmem [resolvable:$true] %s199
          %205 = dma.hbm_to_vmem [thread:$0]  %s198, 3072, %s200, %s189, 64, 64, 4
        $region24: #{eblock_forward.1} parent=19 // pred_fallthru
          _
        // Predicated region
        $region25: #{eblock_forward.1} parent=19 // pred_check
          %p206 = pneg %p84
        $region26: #{eblock_forward.1} parent=19 // pred_check_branch
          %208 = sbr.rel (%p206) target = $region28
        $region27: #{eblock_forward.1} parent=19 // pred_region
          %p209 = scmp.lt.s32.totalorder %s17, 7
          %s210 = scalar_select %p209, %s17, 7
          %s211 = scalar_lea.vmem %s2, %s210
        $region28: #{eblock_forward.1} parent=19 // pred_fallthru
          _
        // Predicated region
        $region29: #{eblock_forward.1} parent=19 // pred_check
          %p212 = pneg %p110
        $region30: #{eblock_forward.1} parent=19 // pred_check_branch
          %214 = sbr.rel (%p212) target = $region32
        $region31: #{eblock_forward.1} parent=19 // pred_region
          %s215 = sand.u32 %s100, 1
          %s216 = scalar_lea.sflag [#allocation6], %s215
          %s217 = sand.u32 %s100, 1
          %s218 = smul.addr %s217, 192
          %s219 = scalar_lea.vmem [#allocation5], %s218
          %s221 = ssub.s32 3072, 3072
          %222 = vsyncadd %s216, %s221
          %s223 = smul.addr %s17, 48
          %s224 = smul.addr %s223, 64
          %s225 = scalar_lea.hbm %s3, %s224
          %s226 = sshll.u32 %s219, 4
          %s227 = int_to_ptr.vmem [resolvable:$true] %s226
          %232 = dma.hbm_to_vmem [thread:$0]  %s225, 3072, %s227, %s216, 64, 64, 4
        $region32: #{eblock_forward.1} parent=19 // pred_fallthru
          _
        // Predicated region
        $region33: #{eblock_forward.1} parent=19 // pred_check
          %p233 = pneg %p136
        $region34: #{eblock_forward.1} parent=19 // pred_check_branch
          %235 = sbr.rel (%p233) target = $region36
        $region35: #{eblock_forward.1} parent=19 // pred_region
          %p236 = scmp.lt.s32.totalorder %s17, 7
          %s237 = scalar_select %p236, %s17, 7
          %s238 = scalar_lea.vmem %s4, %s237
        $region36: #{eblock_forward.1} parent=19 // pred_fallthru
          _
      $region20: #{eblock_forward.1} parent=5 // pred_fallthru
        _
      %p239 = scmp.le.s32.totalorder 1, %s17
      %p240 = scmp.lt.s32.totalorder %s17, 9
      %p241 = pnand %p239, %p240
      %p242 = pneg %p241
      // Predicated region
      $region37: #{eblock_forward.1} parent=5 // pred_check
        _
      $region38: #{eblock_forward.1} parent=5 // pred_check_branch
        %244 = sbr.rel (%p241) target = $region40
      $region39: #{eblock_forward.1} parent=5 // pred_region
        %s245 = ssub.s32 %s17, 1
        %s246 = sand.u32 %s51, 1
        %s247 = scalar_lea.sflag [#allocation4], %s246
        %s248 = sand.u32 %s51, 1
        %s249 = smul.addr %s248, 192
        %s250 = scalar_lea.vmem [#allocation3], %s249
        // Predicated region
        $region41: #{eblock_forward.1} parent=39 // pred_check
          %p251 = pneg %p64
        $region42: #{eblock_forward.1} parent=39 // pred_check_branch
          %253 = sbr.rel (%p251) target = $region44
        $region43: #{eblock_forward.1} parent=39 // pred_region
          %254 = dma.done %s247, 3072
        $region44: #{eblock_forward.1} parent=39 // pred_fallthru
          _
        %s255 = sand.u32 %s103, 1
        %s256 = scalar_lea.sflag [#allocation6], %s255
        %s257 = sand.u32 %s103, 1
        %s258 = smul.addr %s257, 192
        %s259 = scalar_lea.vmem [#allocation5], %s258
        // Predicated region
        $region45: #{eblock_forward.1} parent=39 // pred_check
          %p260 = pneg %p116
        $region46: #{eblock_forward.1} parent=39 // pred_check_branch
          %262 = sbr.rel (%p260) target = $region48
        $region47: #{eblock_forward.1} parent=39 // pred_region
          %263 = dma.done %s256, 3072
        $region48: #{eblock_forward.1} parent=39 // pred_fallthru
          _
        %p264 = pneg %p38
        %p265 = pneg %p35
        %s266 = sand.u32 %s51, 1
        %s267 = scalar_lea.sflag [#allocation4], %s266
        %s268 = sand.u32 %s51, 1
        %s269 = smul.addr %s268, 192
        %s270 = scalar_lea.vmem [#allocation3], %s269
        %p271 = pneg %p64
        %p272 = pneg %p61
        %p273 = scmp.lt.s32.totalorder %s22, 7
        %s274 = scalar_select %p273, %s22, 7
        %s275 = scalar_lea.vmem %s2, %s274
        %p276 = pneg %p90
        %p277 = pneg %p87
        %s278 = sand.u32 %s103, 1
        %s279 = scalar_lea.sflag [#allocation6], %s278
        %s280 = sand.u32 %s103, 1
        %s281 = smul.addr %s280, 192
        %s282 = scalar_lea.vmem [#allocation5], %s281
        %p283 = pneg %p116
        %p284 = pneg %p113
        %p285 = scmp.lt.s32.totalorder %s22, 7
        %s286 = scalar_select %p285, %s22, 7
        %s287 = scalar_lea.vmem %s4, %s286
        %p288 = pneg %p142
        %p289 = pneg %p139
        %p290 = pneg %p163
        %p291 = pneg %p160
        %p292 = scmp.lt.s32.totalorder %s22, 7
        %s293 = scalar_select %p292, %s22, 7
        %s294 = scalar_lea.vmem %s2, %s293
        %p295 = scmp.lt.s32.totalorder %s22, 7
        %s296 = scalar_select %p295, %s22, 7
        %s297 = scalar_lea.vmem %s4, %s296
        %p299 = scmp.eq.s32.totalorder %s22, 0
        // Predicated region
        $region49: #{eblock_forward.1} parent=39 // pred_check
          %p300 = pneg %p299
        $region50: #{eblock_forward.1} parent=39 // pred_check_branch
          %302 = sbr.rel (%p300) target = $region52
        $region51: #{eblock_forward.1} parent=39 // pred_region
          %v303 = vld [vmem:[%s0] sm:$0xff]
          %v304 = vld [vmem:[%s0 + $0x8] sm:$0xff]
          %v305 = vld [vmem:[%s0 + $0x10] sm:$0xff]
          %v306 = vld [vmem:[%s0 + $0x18] sm:$0xff]
          %307 = vst [vmem:[#allocation2] sm:$0xff] %v303
          %308 = vst [vmem:[#allocation2 + $0x8] sm:$0xff] %v304
          %309 = vst [vmem:[#allocation2 + $0x10] sm:$0xff] %v305
          %310 = vst [vmem:[#allocation2 + $0x18] sm:$0xff] %v306
        $region52: #{eblock_forward.1} parent=39 // pred_fallthru
          _
        %v311 = vld [vmem:[#allocation2] sm:$0xff]
        %v312 = vld [vmem:[#allocation2 + $0x8] sm:$0xff]
        %v313 = vld [vmem:[#allocation2 + $0x10] sm:$0xff]
        %v314 = vld [vmem:[#allocation2 + $0x18] sm:$0xff]
        %v315 = vlaneseq
        %v316 = vshrl.u32 %v315, 7
        %v317 = vadd.s32 %v316, 8
        %v318 = vadd.s32 %v316, 16
        %v319 = vadd.s32 %v316, 24
        %vm320 = vcmp.lt.s32.totalorder %v316, 0
        %v321 = vsub.s32 0, %v316
        %v322 = vsel %vm320, %v321, %v316
        %v323 = vshrl.u32 %v322, 4
        %v324 = vand.u32 %v322, 15
        %v325 = vsub.s32 0, %v324
        %v326 = vsel %vm320, %v325, %v324
        %vm327 = vcmp.lt.s32.totalorder %v317, 0
        %v328 = vsub.s32 0, %v317
        %v329 = vsel %vm327, %v328, %v317
        %v330 = vshrl.u32 %v329, 4
        %v331 = vand.u32 %v329, 15
        %v332 = vsub.s32 0, %v331
        %v333 = vsel %vm327, %v332, %v331
        %vm334 = vcmp.lt.s32.totalorder %v318, 0
        %v335 = vsub.s32 0, %v318
        %v336 = vsel %vm334, %v335, %v318
        %v337 = vshrl.u32 %v336, 4
        %v338 = vand.u32 %v336, 15
        %v339 = vsub.s32 0, %v338
        %v340 = vsel %vm334, %v339, %v338
        %vm341 = vcmp.lt.s32.totalorder %v319, 0
        %v342 = vsub.s32 0, %v319
        %v343 = vsel %vm341, %v342, %v319
        %v344 = vshrl.u32 %v343, 4
        %v345 = vand.u32 %v343, 15
        %v346 = vsub.s32 0, %v345
        %v347 = vsel %vm341, %v346, %v345
        %vm348 = vcmp.ne.s32.totalorder %v326, 0
        %vm349 = vcmp.ne.s32.totalorder %v333, 0
        %vm350 = vcmp.ne.s32.totalorder %v340, 0
        %vm351 = vcmp.ne.s32.totalorder %v347, 0
        %vm352 = vcmp.lt.s32.totalorder %v326, 0
        %vm353 = vcmp.lt.s32.totalorder %v333, 0
        %vm354 = vcmp.lt.s32.totalorder %v340, 0
        %vm355 = vcmp.lt.s32.totalorder %v347, 0
        %vm356 = vmand %vm352, %vm348
        %vm357 = vmand %vm353, %vm349
        %vm358 = vmand %vm354, %vm350
        %vm359 = vmand %vm355, %vm351
        %v360 = vadd.s32 %v326, 16
        %v361 = vadd.s32 %v333, 16
        %v362 = vadd.s32 %v340, 16
        %v363 = vadd.s32 %v347, 16
        %v364 = vsel %vm356, %v360, %v326
        %v365 = vsel %vm357, %v361, %v333
        %v366 = vsel %vm358, %v362, %v340
        %v367 = vsel %vm359, %v363, %v347
        %vm368 = vcmp.eq.s32.totalorder %v364, 0
        %vm369 = vcmp.eq.s32.totalorder %v365, 0
        %vm370 = vcmp.eq.s32.totalorder %v366, 0
        %vm371 = vcmp.eq.s32.totalorder %v367, 0
        %vm372 = vcmp.eq.s32.totalorder %v364, 15
        %vm373 = vcmp.eq.s32.totalorder %v365, 15
        %vm374 = vcmp.eq.s32.totalorder %v366, 15
        %vm375 = vcmp.eq.s32.totalorder %v367, 15
        %v376 = vrot.slane %v311, 7
        %v377 = vrot.slane %v312, 7
        %v378 = vrot.slane %v313, 7
        %v379 = vrot.slane %v314, 7
        %vm380 = vcmp.lt.s32.totalorder %v316, 1
        %v381 = vsel %vm380, %v378, %v379
        %v382 = vsel %vm380, %v377, %v378
        %v383 = vsel %vm380, %v376, %v377
        %v384 = vsel %vm380, %v379, %v376
        %v385 = vsel %vm368, 1, 0
        %v386 = vsel %vm369, 1, 0
        %v387 = vsel %vm370, 1, 0
        %v388 = vsel %vm371, 1, 0
        %vm389 = vcmp.eq.s32.totalorder %v385, 1
        %vm390 = vcmp.eq.s32.totalorder %v386, 1
        %vm391 = vcmp.eq.s32.totalorder %v387, 1
        %vm392 = vcmp.eq.s32.totalorder %v388, 1
        %v393 = vsel %vm389, 0.0, %v384
        %v394 = vsel %vm390, 0.0, %v383
        %v395 = vsel %vm391, 0.0, %v382
        %v396 = vsel %vm392, 0.0, %v381
        %v397 = vrot.slane %v311, 1
        %v398 = vrot.slane %v312, 1
        %v399 = vrot.slane %v313, 1
        %v400 = vrot.slane %v314, 1
        %vm401 = vcmp.lt.s32.totalorder %v316, 7
        %v402 = vsel %vm401, %v399, %v400
        %v403 = vsel %vm401, %v398, %v399
        %v404 = vsel %vm401, %v397, %v398
        %v405 = vsel %vm401, %v400, %v397
        %v406 = vsel %vm372, 1, 0
        %v407 = vsel %vm373, 1, 0
        %v408 = vsel %vm374, 1, 0
        %v409 = vsel %vm375, 1, 0
        %vm410 = vcmp.eq.s32.totalorder %v406, 1
        %vm411 = vcmp.eq.s32.totalorder %v407, 1
        %vm412 = vcmp.eq.s32.totalorder %v408, 1
        %vm413 = vcmp.eq.s32.totalorder %v409, 1
        %v414 = vsel %vm410, 0.0, %v404
        %v415 = vsel %vm411, 0.0, %v403
        %v416 = vsel %vm412, 0.0, %v402
        %v417 = vsel %vm413, 0.0, %v405
        %v418 = vpack.c.bf16 %v394, %v393
        %v419 = vpack.c.bf16 %v312, %v311
        %v420 = vpack.c.bf16 %v415, %v414
        %v421 = vpack.c.bf16 %v396, %v395
        %v422 = vpack.c.bf16 %v314, %v313
        %v423 = vpack.c.bf16 %v417, %v416
        %v424 = vld [vmem:[%s250] sm:$0xf]
        %v425 = vld [vmem:[%s250 + $0x4] sm:$0xf]
        %v426 = vld [vmem:[%s250 + $0x8] sm:$0xf]
        %v427 = vld [vmem:[%s250 + $0xc] sm:$0xf]
        %v428 = vld [vmem:[%s250 + $0x10] sm:$0xf]
        %v429 = vld [vmem:[%s250 + $0x14] sm:$0xf]
        %v430 = vld [vmem:[%s250 + $0x18] sm:$0xf]
        %v431 = vld [vmem:[%s250 + $0x1c] sm:$0xf]
        %v432 = vld [vmem:[%s250 + $0x20] sm:$0xf]
        %v433 = vld [vmem:[%s250 + $0x24] sm:$0xf]
        %v434 = vld [vmem:[%s250 + $0x28] sm:$0xf]
        %v435 = vld [vmem:[%s250 + $0x2c] sm:$0xf]
        %v436 = vld [vmem:[%s250 + $0x30] sm:$0xf]
        %v437 = vld [vmem:[%s250 + $0x34] sm:$0xf]
        %v438 = vld [vmem:[%s250 + $0x38] sm:$0xf]
        %v439 = vld [vmem:[%s250 + $0x3c] sm:$0xf]
        %v440 = vld [vmem:[%s250 + $0x40] sm:$0xf]
        %v441 = vld [vmem:[%s250 + $0x44] sm:$0xf]
        %v442 = vld [vmem:[%s250 + $0x48] sm:$0xf]
        %v443 = vld [vmem:[%s250 + $0x4c] sm:$0xf]
        %v444 = vld [vmem:[%s250 + $0x50] sm:$0xf]
        %v445 = vld [vmem:[%s250 + $0x54] sm:$0xf]
        %v446 = vld [vmem:[%s250 + $0x58] sm:$0xf]
        %v447 = vld [vmem:[%s250 + $0x5c] sm:$0xf]
        %v448 = vld [vmem:[%s250 + $0x60] sm:$0xf]
        %v449 = vld [vmem:[%s250 + $0x64] sm:$0xf]
        %v450 = vld [vmem:[%s250 + $0x68] sm:$0xf]
        %v451 = vld [vmem:[%s250 + $0x6c] sm:$0xf]
        %v452 = vld [vmem:[%s250 + $0x70] sm:$0xf]
        %v453 = vld [vmem:[%s250 + $0x74] sm:$0xf]
        %v454 = vld [vmem:[%s250 + $0x78] sm:$0xf]
        %v455 = vld [vmem:[%s250 + $0x7c] sm:$0xf]
        %v456 = vld [vmem:[%s250 + $0x80] sm:$0xf]
        %v457 = vld [vmem:[%s250 + $0x84] sm:$0xf]
        %v458 = vld [vmem:[%s250 + $0x88] sm:$0xf]
        %v459 = vld [vmem:[%s250 + $0x8c] sm:$0xf]
        %v460 = vld [vmem:[%s250 + $0x90] sm:$0xf]
        %v461 = vld [vmem:[%s250 + $0x94] sm:$0xf]
        %v462 = vld [vmem:[%s250 + $0x98] sm:$0xf]
        %v463 = vld [vmem:[%s250 + $0x9c] sm:$0xf]
        %v464 = vld [vmem:[%s250 + $0xa0] sm:$0xf]
        %v465 = vld [vmem:[%s250 + $0xa4] sm:$0xf]
        %v466 = vld [vmem:[%s250 + $0xa8] sm:$0xf]
        %v467 = vld [vmem:[%s250 + $0xac] sm:$0xf]
        %v468 = vld [vmem:[%s250 + $0xb0] sm:$0xf]
        %v469 = vld [vmem:[%s250 + $0xb4] sm:$0xf]
        %v470 = vld [vmem:[%s250 + $0xb8] sm:$0xf]
        %v471 = vld [vmem:[%s250 + $0xbc] sm:$0xf]
        %v472 = vld [vmem:[%s294] sm:$0x1]
        %v474 = vlaneseq
        %v475 = vshrl.u32 %v474, 7
        %v476 = vsub.s32 0, %v475
        %v477 = vrot.slane %v472, %v476
        %v527 = vunpack.c.l.b16 %v424
        %v528 = vunpack.c.l.b16 %v425
        %v529 = vunpack.c.l.b16 %v426
        %v530 = vunpack.c.l.b16 %v427
        %v531 = vunpack.c.l.b16 %v428
        %v532 = vunpack.c.l.b16 %v429
        %v533 = vunpack.c.l.b16 %v430
        %v534 = vunpack.c.l.b16 %v431
        %v535 = vunpack.c.l.b16 %v432
        %v536 = vunpack.c.l.b16 %v433
        %v537 = vunpack.c.l.b16 %v434
        %v538 = vunpack.c.l.b16 %v435
        %v539 = vunpack.c.l.b16 %v436
        %v540 = vunpack.c.l.b16 %v437
        %v541 = vunpack.c.l.b16 %v438
        %v542 = vunpack.c.l.b16 %v439
        %v543 = vunpack.c.l.b16 %v440
        %v544 = vunpack.c.l.b16 %v441
        %v545 = vunpack.c.l.b16 %v442
        %v546 = vunpack.c.l.b16 %v443
        %v547 = vunpack.c.l.b16 %v444
        %v548 = vunpack.c.l.b16 %v445
        %v549 = vunpack.c.l.b16 %v446
        %v550 = vunpack.c.l.b16 %v447
        %v551 = vunpack.c.l.b16 %v448
        %v552 = vunpack.c.l.b16 %v449
        %v553 = vunpack.c.l.b16 %v450
        %v554 = vunpack.c.l.b16 %v451
        %v555 = vunpack.c.l.b16 %v452
        %v556 = vunpack.c.l.b16 %v453
        %v557 = vunpack.c.l.b16 %v454
        %v558 = vunpack.c.l.b16 %v455
        %v559 = vunpack.c.l.b16 %v456
        %v560 = vunpack.c.l.b16 %v457
        %v561 = vunpack.c.l.b16 %v458
        %v562 = vunpack.c.l.b16 %v459
        %v563 = vunpack.c.l.b16 %v460
        %v564 = vunpack.c.l.b16 %v461
        %v565 = vunpack.c.l.b16 %v462
        %v566 = vunpack.c.l.b16 %v463
        %v567 = vunpack.c.l.b16 %v464
        %v568 = vunpack.c.l.b16 %v465
        %v569 = vunpack.c.l.b16 %v466
        %v570 = vunpack.c.l.b16 %v467
        %v571 = vunpack.c.l.b16 %v468
        %v572 = vunpack.c.l.b16 %v469
        %v573 = vunpack.c.l.b16 %v470
        %v574 = vunpack.c.l.b16 %v471
        %v575 = vpack.c.b16 %v528, %v527
        %v576 = vpack.c.b16 %v530, %v529
        %v577 = vpack.c.b16 %v532, %v531
        %v578 = vpack.c.b16 %v534, %v533
        %v579 = vpack.c.b16 %v536, %v535
        %v580 = vpack.c.b16 %v538, %v537
        %v581 = vpack.c.b16 %v540, %v539
        %v582 = vpack.c.b16 %v542, %v541
        %v583 = vpack.c.b16 %v544, %v543
        %v584 = vpack.c.b16 %v546, %v545
        %v585 = vpack.c.b16 %v548, %v547
        %v586 = vpack.c.b16 %v550, %v549
        %v587 = vpack.c.b16 %v552, %v551
        %v588 = vpack.c.b16 %v554, %v553
        %v589 = vpack.c.b16 %v556, %v555
        %v590 = vpack.c.b16 %v558, %v557
        %v591 = vpack.c.b16 %v560, %v559
        %v592 = vpack.c.b16 %v562, %v561
        %v593 = vpack.c.b16 %v564, %v563
        %v594 = vpack.c.b16 %v566, %v565
        %v595 = vpack.c.b16 %v568, %v567
        %v596 = vpack.c.b16 %v570, %v569
        %v597 = vpack.c.b16 %v572, %v571
        %v598 = vpack.c.b16 %v574, %v573
        %623 = vmatprep.subr.bf16.mxu0 0
        %624 = vmatpush1.bf16.msra.mxu0 %v582
        %625 = vmatprep.subr.bf16.mxu0 0
        %626 = vmatpush1.bf16.msra.mxu0 %v581
        %627 = vmatprep.subr.bf16.mxu0 0
        %628 = vmatpush1.bf16.msra.mxu0 %v580
        %629 = vmatprep.subr.bf16.mxu0 0
        %630 = vmatpush1.bf16.msra.mxu0 %v579
        %631 = vmatprep.subr.bf16.mxu0 0
        %632 = vmatpush1.bf16.msra.mxu0 %v578
        %633 = vmatprep.subr.bf16.mxu0 0
        %634 = vmatpush1.bf16.msra.mxu0 %v577
        %635 = vmatprep.subr.bf16.mxu0 0
        %636 = vmatpush1.bf16.msra.mxu0 %v576
        %637 = vmatprep.subr.bf16.mxu0 0
        %638 = vmatpush1.bf16.msra.mxu0 %v575
        %639 = vmatprep.subr.bf16.mxu0 0
        %640 = vmatpush2.bf16.msra.mxu0 %v590
        %641 = vmatprep.subr.bf16.mxu0 0
        %642 = vmatpush2.bf16.msra.mxu0 %v589
        %643 = vmatprep.subr.bf16.mxu0 0
        %644 = vmatpush2.bf16.msra.mxu0 %v588
        %645 = vmatprep.subr.bf16.mxu0 0
        %646 = vmatpush2.bf16.msra.mxu0 %v587
        %647 = vmatprep.subr.bf16.mxu0 0
        %648 = vmatpush2.bf16.msra.mxu0 %v586
        %649 = vmatprep.subr.bf16.mxu0 0
        %650 = vmatpush2.bf16.msra.mxu0 %v585
        %651 = vmatprep.subr.bf16.mxu0 0
        %652 = vmatpush2.bf16.msra.mxu0 %v584
        %653 = vmatprep.subr.bf16.mxu0 0
        %654 = vmatpush2.bf16.msra.mxu0 %v583
        %655 = vmatprep.mubr.bf16.mxu0 %v419
        %656 = vmatmul.mubr.bf16.gmra.mxu0 %v418
        %v657 = vpop.f32.mrf.mxu0
        %v658 = vadd.f32 %v477, %v657
        %v659 = vpop.f32.mrf.mxu0
        %v660 = vpop.f32.mrf.mxu0
        %v661 = vadd.f32 %v477, %v660
        %v662 = vpop.f32.mrf.mxu0
        %663 = vmatprep.mubr.bf16.mxu0 %v422
        %664 = vmatmul.mubr.bf16.gmra.mxu0 %v421
        %v665 = vpop.f32.mrf.mxu0
        %v666 = vadd.f32 %v477, %v665
        %v667 = vpop.f32.mrf.mxu0
        %v668 = vpop.f32.mrf.mxu0
        %v669 = vadd.f32 %v477, %v668
        %v670 = vpop.f32.mrf.mxu0
        %671 = vdwg.mxu0
        %672 = vmatprep.subr.bf16.mxu0 0
        %673 = vmatpush1.bf16.msra.mxu0 %v598
        %674 = vmatprep.subr.bf16.mxu0 0
        %675 = vmatpush1.bf16.msra.mxu0 %v597
        %676 = vmatprep.subr.bf16.mxu0 0
        %677 = vmatpush1.bf16.msra.mxu0 %v596
        %678 = vmatprep.subr.bf16.mxu0 0
        %679 = vmatpush1.bf16.msra.mxu0 %v595
        %680 = vmatprep.subr.bf16.mxu0 0
        %681 = vmatpush1.bf16.msra.mxu0 %v594
        %682 = vmatprep.subr.bf16.mxu0 0
        %683 = vmatpush1.bf16.msra.mxu0 %v593
        %684 = vmatprep.subr.bf16.mxu0 0
        %685 = vmatpush1.bf16.msra.mxu0 %v592
        %686 = vmatprep.subr.bf16.mxu0 0
        %687 = vmatpush1.bf16.msra.mxu0 %v591
        %688 = vmatprep.subr.bf16.mxu0 0
        %689 = vmatpush2.bf16.msra.mxu0 0
        %690 = vmatprep.subr.bf16.mxu0 0
        %691 = vmatpush2.bf16.msra.mxu0 0
        %692 = vmatprep.subr.bf16.mxu0 0
        %693 = vmatpush2.bf16.msra.mxu0 0
        %694 = vmatprep.subr.bf16.mxu0 0
        %695 = vmatpush2.bf16.msra.mxu0 0
        %696 = vmatprep.subr.bf16.mxu0 0
        %697 = vmatpush2.bf16.msra.mxu0 0
        %698 = vmatprep.subr.bf16.mxu0 0
        %699 = vmatpush2.bf16.msra.mxu0 0
        %700 = vmatprep.subr.bf16.mxu0 0
        %701 = vmatpush2.bf16.msra.mxu0 0
        %702 = vmatprep.subr.bf16.mxu0 0
        %703 = vmatpush2.bf16.msra.mxu0 0
        %704 = vmatprep.mubr.bf16.mxu0 0
        %705 = vmatmul.mubr.bf16.gmra.mxu0 %v420
        %v706 = vpop.f32.mrf.mxu0
        %v707 = vadd.f32 %v658, %v706
        %v708 = vpop.f32.mrf.mxu0
        %v709 = vpop.f32.mrf.mxu0
        %v710 = vadd.f32 %v661, %v709
        %v711 = vpop.f32.mrf.mxu0
        %712 = vmatprep.mubr.bf16.mxu0 0
        %713 = vmatmul.mubr.bf16.gmra.mxu0 %v423
        %v714 = vpop.f32.mrf.mxu0
        %v715 = vadd.f32 %v666, %v714
        %v716 = vpop.f32.mrf.mxu0
        %v717 = vpop.f32.mrf.mxu0
        %v718 = vadd.f32 %v669, %v717
        %v719 = vpop.f32.mrf.mxu0
        %720 = vdwg.mxu0
        %v721 = vmax.f32 %v707, 0.0
        %v722 = vmax.f32 %v710, 0.0
        %v723 = vmax.f32 %v715, 0.0
        %v724 = vmax.f32 %v718, 0.0
        %v725 = vrot.slane %v721, 7
        %v726 = vrot.slane %v722, 7
        %v727 = vrot.slane %v723, 7
        %v728 = vrot.slane %v724, 7
        %v729 = vsel %vm380, %v727, %v728
        %v730 = vsel %vm380, %v726, %v727
        %v731 = vsel %vm380, %v725, %v726
        %v732 = vsel %vm380, %v728, %v725
        %v733 = vsel %vm389, 0.0, %v732
        %v734 = vsel %vm390, 0.0, %v731
        %v735 = vsel %vm391, 0.0, %v730
        %v736 = vsel %vm392, 0.0, %v729
        %v737 = vrot.slane %v721, 1
        %v738 = vrot.slane %v722, 1
        %v739 = vrot.slane %v723, 1
        %v740 = vrot.slane %v724, 1
        %v741 = vsel %vm401, %v739, %v740
        %v742 = vsel %vm401, %v738, %v739
        %v743 = vsel %vm401, %v737, %v738
        %v744 = vsel %vm401, %v740, %v737
        %v745 = vsel %vm410, 0.0, %v743
        %v746 = vsel %vm411, 0.0, %v742
        %v747 = vsel %vm412, 0.0, %v741
        %v748 = vsel %vm413, 0.0, %v744
        %v749 = vpack.c.bf16 %v734, %v733
        %v750 = vpack.c.bf16 %v722, %v721
        %v751 = vpack.c.bf16 %v746, %v745
        %v752 = vpack.c.bf16 %v736, %v735
        %v753 = vpack.c.bf16 %v724, %v723
        %v754 = vpack.c.bf16 %v748, %v747
        %v755 = vld [vmem:[%s259] sm:$0xf]
        %v756 = vld [vmem:[%s259 + $0x4] sm:$0xf]
        %v757 = vld [vmem:[%s259 + $0x8] sm:$0xf]
        %v758 = vld [vmem:[%s259 + $0xc] sm:$0xf]
        %v759 = vld [vmem:[%s259 + $0x10] sm:$0xf]
        %v760 = vld [vmem:[%s259 + $0x14] sm:$0xf]
        %v761 = vld [vmem:[%s259 + $0x18] sm:$0xf]
        %v762 = vld [vmem:[%s259 + $0x1c] sm:$0xf]
        %v763 = vld [vmem:[%s259 + $0x20] sm:$0xf]
        %v764 = vld [vmem:[%s259 + $0x24] sm:$0xf]
        %v765 = vld [vmem:[%s259 + $0x28] sm:$0xf]
        %v766 = vld [vmem:[%s259 + $0x2c] sm:$0xf]
        %v767 = vld [vmem:[%s259 + $0x30] sm:$0xf]
        %v768 = vld [vmem:[%s259 + $0x34] sm:$0xf]
        %v769 = vld [vmem:[%s259 + $0x38] sm:$0xf]
        %v770 = vld [vmem:[%s259 + $0x3c] sm:$0xf]
        %v771 = vld [vmem:[%s259 + $0x40] sm:$0xf]
        %v772 = vld [vmem:[%s259 + $0x44] sm:$0xf]
        %v773 = vld [vmem:[%s259 + $0x48] sm:$0xf]
        %v774 = vld [vmem:[%s259 + $0x4c] sm:$0xf]
        %v775 = vld [vmem:[%s259 + $0x50] sm:$0xf]
        %v776 = vld [vmem:[%s259 + $0x54] sm:$0xf]
        %v777 = vld [vmem:[%s259 + $0x58] sm:$0xf]
        %v778 = vld [vmem:[%s259 + $0x5c] sm:$0xf]
        %v779 = vld [vmem:[%s259 + $0x60] sm:$0xf]
        %v780 = vld [vmem:[%s259 + $0x64] sm:$0xf]
        %v781 = vld [vmem:[%s259 + $0x68] sm:$0xf]
        %v782 = vld [vmem:[%s259 + $0x6c] sm:$0xf]
        %v783 = vld [vmem:[%s259 + $0x70] sm:$0xf]
        %v784 = vld [vmem:[%s259 + $0x74] sm:$0xf]
        %v785 = vld [vmem:[%s259 + $0x78] sm:$0xf]
        %v786 = vld [vmem:[%s259 + $0x7c] sm:$0xf]
        %v787 = vld [vmem:[%s259 + $0x80] sm:$0xf]
        %v788 = vld [vmem:[%s259 + $0x84] sm:$0xf]
        %v789 = vld [vmem:[%s259 + $0x88] sm:$0xf]
        %v790 = vld [vmem:[%s259 + $0x8c] sm:$0xf]
        %v791 = vld [vmem:[%s259 + $0x90] sm:$0xf]
        %v792 = vld [vmem:[%s259 + $0x94] sm:$0xf]
        %v793 = vld [vmem:[%s259 + $0x98] sm:$0xf]
        %v794 = vld [vmem:[%s259 + $0x9c] sm:$0xf]
        %v795 = vld [vmem:[%s259 + $0xa0] sm:$0xf]
        %v796 = vld [vmem:[%s259 + $0xa4] sm:$0xf]
        %v797 = vld [vmem:[%s259 + $0xa8] sm:$0xf]
        %v798 = vld [vmem:[%s259 + $0xac] sm:$0xf]
        %v799 = vld [vmem:[%s259 + $0xb0] sm:$0xf]
        %v800 = vld [vmem:[%s259 + $0xb4] sm:$0xf]
        %v801 = vld [vmem:[%s259 + $0xb8] sm:$0xf]
        %v802 = vld [vmem:[%s259 + $0xbc] sm:$0xf]
        %v803 = vld [vmem:[%s297] sm:$0x1]
        %v805 = vlaneseq
        %v806 = vshrl.u32 %v805, 7
        %v807 = vsub.s32 0, %v806
        %v808 = vrot.slane %v803, %v807
        %v858 = vunpack.c.l.b16 %v755
        %v859 = vunpack.c.l.b16 %v756
        %v860 = vunpack.c.l.b16 %v757
        %v861 = vunpack.c.l.b16 %v758
        %v862 = vunpack.c.l.b16 %v759
        %v863 = vunpack.c.l.b16 %v760
        %v864 = vunpack.c.l.b16 %v761
        %v865 = vunpack.c.l.b16 %v762
        %v866 = vunpack.c.l.b16 %v763
        %v867 = vunpack.c.l.b16 %v764
        %v868 = vunpack.c.l.b16 %v765
        %v869 = vunpack.c.l.b16 %v766
        %v870 = vunpack.c.l.b16 %v767
        %v871 = vunpack.c.l.b16 %v768
        %v872 = vunpack.c.l.b16 %v769
        %v873 = vunpack.c.l.b16 %v770
        %v874 = vunpack.c.l.b16 %v771
        %v875 = vunpack.c.l.b16 %v772
        %v876 = vunpack.c.l.b16 %v773
        %v877 = vunpack.c.l.b16 %v774
        %v878 = vunpack.c.l.b16 %v775
        %v879 = vunpack.c.l.b16 %v776
        %v880 = vunpack.c.l.b16 %v777
        %v881 = vunpack.c.l.b16 %v778
        %v882 = vunpack.c.l.b16 %v779
        %v883 = vunpack.c.l.b16 %v780
        %v884 = vunpack.c.l.b16 %v781
        %v885 = vunpack.c.l.b16 %v782
        %v886 = vunpack.c.l.b16 %v783
        %v887 = vunpack.c.l.b16 %v784
        %v888 = vunpack.c.l.b16 %v785
        %v889 = vunpack.c.l.b16 %v786
        %v890 = vunpack.c.l.b16 %v787
        %v891 = vunpack.c.l.b16 %v788
        %v892 = vunpack.c.l.b16 %v789
        %v893 = vunpack.c.l.b16 %v790
        %v894 = vunpack.c.l.b16 %v791
        %v895 = vunpack.c.l.b16 %v792
        %v896 = vunpack.c.l.b16 %v793
        %v897 = vunpack.c.l.b16 %v794
        %v898 = vunpack.c.l.b16 %v795
        %v899 = vunpack.c.l.b16 %v796
        %v900 = vunpack.c.l.b16 %v797
        %v901 = vunpack.c.l.b16 %v798
        %v902 = vunpack.c.l.b16 %v799
        %v903 = vunpack.c.l.b16 %v800
        %v904 = vunpack.c.l.b16 %v801
        %v905 = vunpack.c.l.b16 %v802
        %v906 = vpack.c.b16 %v859, %v858
        %v907 = vpack.c.b16 %v861, %v860
        %v908 = vpack.c.b16 %v863, %v862
        %v909 = vpack.c.b16 %v865, %v864
        %v910 = vpack.c.b16 %v867, %v866
        %v911 = vpack.c.b16 %v869, %v868
        %v912 = vpack.c.b16 %v871, %v870
        %v913 = vpack.c.b16 %v873, %v872
        %v914 = vpack.c.b16 %v875, %v874
        %v915 = vpack.c.b16 %v877, %v876
        %v916 = vpack.c.b16 %v879, %v878
        %v917 = vpack.c.b16 %v881, %v880
        %v918 = vpack.c.b16 %v883, %v882
        %v919 = vpack.c.b16 %v885, %v884
        %v920 = vpack.c.b16 %v887, %v886
        %v921 = vpack.c.b16 %v889, %v888
        %v922 = vpack.c.b16 %v891, %v890
        %v923 = vpack.c.b16 %v893, %v892
        %v924 = vpack.c.b16 %v895, %v894
        %v925 = vpack.c.b16 %v897, %v896
        %v926 = vpack.c.b16 %v899, %v898
        %v927 = vpack.c.b16 %v901, %v900
        %v928 = vpack.c.b16 %v903, %v902
        %v929 = vpack.c.b16 %v905, %v904
        %954 = vmatprep.subr.bf16.mxu0 0
        %955 = vmatpush1.bf16.msra.mxu0 %v913
        %956 = vmatprep.subr.bf16.mxu0 0
        %957 = vmatpush1.bf16.msra.mxu0 %v912
        %958 = vmatprep.subr.bf16.mxu0 0
        %959 = vmatpush1.bf16.msra.mxu0 %v911
        %960 = vmatprep.subr.bf16.mxu0 0
        %961 = vmatpush1.bf16.msra.mxu0 %v910
        %962 = vmatprep.subr.bf16.mxu0 0
        %963 = vmatpush1.bf16.msra.mxu0 %v909
        %964 = vmatprep.subr.bf16.mxu0 0
        %965 = vmatpush1.bf16.msra.mxu0 %v908
        %966 = vmatprep.subr.bf16.mxu0 0
        %967 = vmatpush1.bf16.msra.mxu0 %v907
        %968 = vmatprep.subr.bf16.mxu0 0
        %969 = vmatpush1.bf16.msra.mxu0 %v906
        %970 = vmatprep.subr.bf16.mxu0 0
        %971 = vmatpush2.bf16.msra.mxu0 %v921
        %972 = vmatprep.subr.bf16.mxu0 0
        %973 = vmatpush2.bf16.msra.mxu0 %v920
        %974 = vmatprep.subr.bf16.mxu0 0
        %975 = vmatpush2.bf16.msra.mxu0 %v919
        %976 = vmatprep.subr.bf16.mxu0 0
        %977 = vmatpush2.bf16.msra.mxu0 %v918
        %978 = vmatprep.subr.bf16.mxu0 0
        %979 = vmatpush2.bf16.msra.mxu0 %v917
        %980 = vmatprep.subr.bf16.mxu0 0
        %981 = vmatpush2.bf16.msra.mxu0 %v916
        %982 = vmatprep.subr.bf16.mxu0 0
        %983 = vmatpush2.bf16.msra.mxu0 %v915
        %984 = vmatprep.subr.bf16.mxu0 0
        %985 = vmatpush2.bf16.msra.mxu0 %v914
        %986 = vmatprep.mubr.bf16.mxu0 %v750
        %987 = vmatmul.mubr.bf16.gmra.mxu0 %v749
        %v988 = vpop.f32.mrf.mxu0
        %v989 = vadd.f32 %v808, %v988
        %v990 = vpop.f32.mrf.mxu0
        %v991 = vpop.f32.mrf.mxu0
        %v992 = vadd.f32 %v808, %v991
        %v993 = vpop.f32.mrf.mxu0
        %994 = vmatprep.mubr.bf16.mxu0 %v753
        %995 = vmatmul.mubr.bf16.gmra.mxu0 %v752
        %v996 = vpop.f32.mrf.mxu0
        %v997 = vadd.f32 %v808, %v996
        %v998 = vpop.f32.mrf.mxu0
        %v999 = vpop.f32.mrf.mxu0
        %v1000 = vadd.f32 %v808, %v999
        %v1001 = vpop.f32.mrf.mxu0
        %1002 = vdwg.mxu0
        %1003 = vmatprep.subr.bf16.mxu0 0
        %1004 = vmatpush1.bf16.msra.mxu0 %v929
        %1005 = vmatprep.subr.bf16.mxu0 0
        %1006 = vmatpush1.bf16.msra.mxu0 %v928
        %1007 = vmatprep.subr.bf16.mxu0 0
        %1008 = vmatpush1.bf16.msra.mxu0 %v927
        %1009 = vmatprep.subr.bf16.mxu0 0
        %1010 = vmatpush1.bf16.msra.mxu0 %v926
        %1011 = vmatprep.subr.bf16.mxu0 0
        %1012 = vmatpush1.bf16.msra.mxu0 %v925
        %1013 = vmatprep.subr.bf16.mxu0 0
        %1014 = vmatpush1.bf16.msra.mxu0 %v924
        %1015 = vmatprep.subr.bf16.mxu0 0
        %1016 = vmatpush1.bf16.msra.mxu0 %v923
        %1017 = vmatprep.subr.bf16.mxu0 0
        %1018 = vmatpush1.bf16.msra.mxu0 %v922
        %1019 = vmatprep.subr.bf16.mxu0 0
        %1020 = vmatpush2.bf16.msra.mxu0 0
        %1021 = vmatprep.subr.bf16.mxu0 0
        %1022 = vmatpush2.bf16.msra.mxu0 0
        %1023 = vmatprep.subr.bf16.mxu0 0
        %1024 = vmatpush2.bf16.msra.mxu0 0
        %1025 = vmatprep.subr.bf16.mxu0 0
        %1026 = vmatpush2.bf16.msra.mxu0 0
        %1027 = vmatprep.subr.bf16.mxu0 0
        %1028 = vmatpush2.bf16.msra.mxu0 0
        %1029 = vmatprep.subr.bf16.mxu0 0
        %1030 = vmatpush2.bf16.msra.mxu0 0
        %1031 = vmatprep.subr.bf16.mxu0 0
        %1032 = vmatpush2.bf16.msra.mxu0 0
        %1033 = vmatprep.subr.bf16.mxu0 0
        %1034 = vmatpush2.bf16.msra.mxu0 0
        %1035 = vmatprep.mubr.bf16.mxu0 0
        %1036 = vmatmul.mubr.bf16.gmra.mxu0 %v751
        %v1037 = vpop.f32.mrf.mxu0
        %v1038 = vadd.f32 %v989, %v1037
        %v1039 = vpop.f32.mrf.mxu0
        %v1040 = vpop.f32.mrf.mxu0
        %v1041 = vadd.f32 %v992, %v1040
        %v1042 = vpop.f32.mrf.mxu0
        %1043 = vmatprep.mubr.bf16.mxu0 0
        %1044 = vmatmul.mubr.bf16.gmra.mxu0 %v754
        %v1045 = vpop.f32.mrf.mxu0
        %v1046 = vadd.f32 %v997, %v1045
        %v1047 = vpop.f32.mrf.mxu0
        %v1048 = vpop.f32.mrf.mxu0
        %v1049 = vadd.f32 %v1000, %v1048
        %v1050 = vpop.f32.mrf.mxu0
        %1051 = vdwg.mxu0
        %v1052 = vadd.f32 %v1038, %v311
        %v1053 = vadd.f32 %v1041, %v312
        %v1054 = vadd.f32 %v1046, %v313
        %v1055 = vadd.f32 %v1049, %v314
        %1056 = vst [vmem:[#allocation2] sm:$0xff] %v1052
        %1057 = vst [vmem:[#allocation2 + $0x8] sm:$0xff] %v1053
        %1058 = vst [vmem:[#allocation2 + $0x10] sm:$0xff] %v1054
        %1059 = vst [vmem:[#allocation2 + $0x18] sm:$0xff] %v1055
        %p1060 = scmp.eq.s32.totalorder %s22, 7
        // Predicated region
        $region53: #{eblock_forward.1} parent=39 // pred_check
          %p1061 = pneg %p1060
        $region54: #{eblock_forward.1} parent=39 // pred_check_branch
          %1063 = sbr.rel (%p1061) target = $region56
        $region55: #{eblock_forward.1} parent=39 // pred_region
          %1064 = vst [vmem:[%s5] sm:$0xff] %v1052
          %1065 = vst [vmem:[%s5 + $0x8] sm:$0xff] %v1053
          %1066 = vst [vmem:[%s5 + $0x10] sm:$0xff] %v1054
          %1067 = vst [vmem:[%s5 + $0x18] sm:$0xff] %v1055
        $region56: #{eblock_forward.1} parent=39 // pred_fallthru
          _
        // Predicated region
        $region57: #{eblock_forward.1} parent=39 // pred_check
          %p1068 = pneg %p160
        $region58: #{eblock_forward.1} parent=39 // pred_check_branch
          %1070 = sbr.rel (%p1068) target = $region60
        $region59: #{eblock_forward.1} parent=39 // pred_region
          _
        $region60: #{eblock_forward.1} parent=39 // pred_fallthru
          _
        // Predicated region
        $region61: #{eblock_forward.1} parent=39 // pred_check
          %p1071 = pneg %p160
        $region62: #{eblock_forward.1} parent=39 // pred_check_branch
          %1073 = sbr.rel (%p1071) target = $region64
        $region63: #{eblock_forward.1} parent=39 // pred_region
          _
        $region64: #{eblock_forward.1} parent=39 // pred_fallthru
          _
      $region40: #{eblock_forward.1} parent=5 // pred_fallthru
        _
      %p1074 = scmp.le.s32.totalorder 2, %s17
      // Predicated region
      $region65: #{eblock_forward.1} parent=5 // pred_check
        %p1075 = pneg %p1074
      $region66: #{eblock_forward.1} parent=5 // pred_check_branch
        %1077 = sbr.rel (%p1075) target = $region68
      $region67: #{eblock_forward.1} parent=5 // pred_region
        %s1078 = ssub.s32 %s17, 2
      $region68: #{eblock_forward.1} parent=5 // pred_fallthru
        _
    $region6: #{eblock_forward.1} parent=1 // loop_footer
      %s21 = sadd.s32 1, %s17
    $region7: #{eblock_forward.1} parent=1 // loop_footer_branch
      %16 = sbr.rel target = $region3
    $region8: #{eblock_forward.1} parent=1 // loop_exit
      _
    %1079 = vsyncpa [#allocation4], 1
    %s1080 = scalar_lea.sflag [#allocation4], 1
    %1081 = vsyncpa %s1080, 1
    %1082 = vsyncpa [#allocation6], 1
    %s1083 = scalar_lea.sflag [#allocation6], 1
    %1084 = vsyncpa %s1083, 1

</llo_original>
